<compile_context>
chip_gen: v7x
topology: tpu7x:2x2x1
jax: 0.10.0
libtpu: 0.0.40
codegen_flags: <defaults>
</compile_context>

<pallas_src>
import functools

import jax
import jax.numpy as jnp
from jax.experimental import pallas as pl
from jax.experimental.pallas import tpu as pltpu


def _fused_mlp_kernel(*refs, num_layers, negative_slope):
    """Whole MLP on one activation tile.

    refs = (x_ref, w0_ref, b0_ref, ..., wL_ref, bL_ref, o_ref)
    Intermediates stay as values in VMEM/vregs — never written back per layer.
    """
    x_ref = refs[0]
    o_ref = refs[-1]
    param_refs = refs[1:-1]

    x = x_ref[...].astype(jnp.float32)
    for layer in range(num_layers):
        w = param_refs[2 * layer][...].astype(jnp.float32)
        b = param_refs[2 * layer + 1][...].astype(jnp.float32)
        y = jnp.dot(x, w, preferred_element_type=jnp.float32) + b
        if layer < num_layers - 1:
            # leaky_relu (slope 0.01) on the VPU, in f32.
            y = jnp.where(y > 0, y, negative_slope * y)
        x = y
    o_ref[...] = x.astype(o_ref.dtype)


def _round_up(x, m):
    return ((x + m - 1) // m) * m


def _pad_params_lane_dense(params):
    """Zero-pad every layer's output features up to a multiple of 128 (and the
    matching input rows of the next layer) so intermediates and the final
    output store are lane-dense.  Zero padding keeps the math exact: padded
    hidden columns evaluate to 0 (bias 0, leaky_relu(0)=0) and meet zero rows
    in the next layer's weight."""
    padded = []
    prev_out = params[0][0].shape[0]  # input_dim, intentionally left unpadded
    for (w, b) in params:
        fin, fout = w.shape
        fout_pad = _round_up(fout, 128)
        w_p = jnp.zeros((prev_out, fout_pad), w.dtype).at[:fin, :fout].set(w)
        b_p = jnp.zeros((1, fout_pad), b.dtype).at[:, :fout].set(b)
        padded.append((w_p, b_p))
        prev_out = fout_pad
    return padded


def encoder_forward(params, x, *, max_tile_m=1024, negative_slope=0.01):
    """Fused Encoder forward: one pallas_call for the whole MLP.

    params: list of (w, b) with w [in, out], b [1, out] (unpadded, as trained).
    x: [batch, input_dim].
    Returns: [batch, output_dim].
    """
    B, D = x.shape
    num_layers = len(params)
    out_dim = params[-1][0].shape[1]

    # --- lane-dense (128-multiple) parameter padding, done once ---
    padded_params = _pad_params_lane_dense(params)
    out_pad = padded_params[-1][0].shape[1]

    # --- batch tile selection ---
    if B < 8:
        tm = B                              # single full-array block
        b_pad = B
    else:
        b8 = _round_up(B, 8)
        tm = min(max_tile_m, b8)
        # Ensure >= 2 grid steps when the batch allows it, so v7x's two
        # TensorCores both get work under dimension_semantics=("parallel",).
        if B >= 16 and b8 <= tm:
            tm = _round_up(-(-B // 2), 8)
        b_pad = _round_up(B, tm)
    grid = (b_pad // tm,)

    if b_pad != B:
        x = jnp.pad(x, ((0, b_pad - B), (0, 0)))

    itemsize = x.dtype.itemsize

    # --- VMEM budget: params (x2 for the double-buffered fallback) +
    #     double-buffered activation/output tiles + live f32 intermediates ---
    param_bytes = sum(int(w.size) * w.dtype.itemsize + int(b.size) * b.dtype.itemsize
                      for w, b in padded_params)
    max_width = max(int(w.shape[1]) for w, _ in padded_params)
    need = (2 * param_bytes
            + 2 * tm * D * itemsize
            + 2 * tm * out_pad * itemsize
            + 2 * tm * max_width * 4)
    vmem_limit = min(max(int(need * 1.5), 16 << 20), 48 << 20)

    # --- advisory cost estimate for the XLA scheduler ---
    flops = 2 * b_pad * sum(int(w.shape[0]) * int(w.shape[1])
                            for w, _ in padded_params)
    bytes_accessed = (b_pad * D * itemsize
                      + param_bytes
                      + b_pad * out_pad * itemsize)
    cost = pl.CostEstimate(flops=flops, transcendentals=0,
                           bytes_accessed=bytes_accessed)

    kernel = functools.partial(
        _fused_mlp_kernel,
        num_layers=num_layers,
        negative_slope=negative_slope,
    )

    def build_and_call(param_pipeline_mode):
        in_specs = [pl.BlockSpec((tm, D), lambda i: (i, 0))]
        flat_params = []
        for (w, b) in padded_params:
            in_specs.append(pl.BlockSpec(w.shape, lambda i: (0, 0),
                                         pipeline_mode=param_pipeline_mode))
            in_specs.append(pl.BlockSpec(b.shape, lambda i: (0, 0),
                                         pipeline_mode=param_pipeline_mode))
            flat_params.extend([w, b])
        out_specs = pl.BlockSpec((tm, out_pad), lambda i: (i, 0))

        return pl.pallas_call(
            kernel,
            out_shape=jax.ShapeDtypeStruct((b_pad, out_pad), x.dtype),
            grid=grid,
            in_specs=in_specs,
            out_specs=out_specs,
            compiler_params=pltpu.CompilerParams(
                dimension_semantics=("parallel",),   # megacore-shard batch axis
                vmem_limit_bytes=vmem_limit,
            ),
            cost_estimate=cost,
        )(x, *flat_params)

    try:
        # Single-buffer the constant-index weight/bias blocks (fetched once).
        out = build_and_call(pl.Buffered(1))
    except Exception:
        # Fallback: default (double) buffering if pipeline_mode is unsupported.
        out = build_and_call(None)

    return out[:B, :out_dim]


def init_encoder_params(key, input_dim, output_dim, num_hidden=3, dtype=jnp.float32):
    """Deterministic synthetic parameters matching the PyTorch module's shapes.

    Layer dims: input_dim -> hidden -> ... -> hidden -> output_dim,
    hidden = 3 * input_dim, total layers = num_hidden + 1.
    Weights stored as [in, out] (transposed vs. torch.nn.Linear.weight).
    """
    hidden_dim = input_dim * 3
    dims = [input_dim] + [hidden_dim] * num_hidden + [output_dim]
    params = []
    for i in range(len(dims) - 1):
        fan_in, fan_out = dims[i], dims[i + 1]
        key, wk, bk = jax.random.split(key, 3)
        bound = 1.0 / jnp.sqrt(jnp.asarray(fan_in, jnp.float32))
        w = jax.random.uniform(wk, (fan_in, fan_out), dtype, -bound, bound)
        b = jax.random.uniform(bk, (1, fan_out), dtype, -bound, bound)
        params.append((w, b))
    return params


def encoder_reference(params, x):
    """Pure-JAX reference for correctness checking."""
    for (w, b) in params[:-1]:
        y = x @ w + b
        x = jnp.where(y > 0, y, 0.01 * y)
    w, b = params[-1]
    return x @ w + b


if __name__ == "__main__":
    key = jax.random.PRNGKey(0)
    batch = 8
    input_dim = 32      # -> hidden_dim = 96 (padded to 128 inside the wrapper)
    output_dim = 16     # padded to 128 inside the wrapper, sliced back outside
    num_hidden = 3

    key, pkey, xkey = jax.random.split(key, 3)
    params = init_encoder_params(pkey, input_dim, output_dim, num_hidden)
    x = jax.random.normal(xkey, (batch, input_dim), jnp.float32)

    out = encoder_forward(params, x)
    out = jax.block_until_ready(out)

    ref = encoder_reference(params, x)
    assert out.shape == (batch, output_dim), out.shape
    assert jnp.allclose(out, ref, atol=1e-5, rtol=1e-5), "mismatch vs reference"

    print("KERNEL_OK")
</pallas_src>

<mosaic_0001>
module attributes {stable_mosaic.version = 11 : i64} {
  func.func @_fused_mlp_kernel(%arg0: i32, %arg1: memref<8x32xf32, #tpu.memory_space<vmem>>, %arg2: memref<32x128xf32, #tpu.memory_space<vmem>>, %arg3: memref<1x128xf32, #tpu.memory_space<vmem>>, %arg4: memref<128x128xf32, #tpu.memory_space<vmem>>, %arg5: memref<1x128xf32, #tpu.memory_space<vmem>>, %arg6: memref<128x128xf32, #tpu.memory_space<vmem>>, %arg7: memref<1x128xf32, #tpu.memory_space<vmem>>, %arg8: memref<128x128xf32, #tpu.memory_space<vmem>>, %arg9: memref<1x128xf32, #tpu.memory_space<vmem>>, %arg10: memref<8x128xf32, #tpu.memory_space<vmem>>) attributes {dimension_semantics = [#tpu.dimension_semantics<parallel>], iteration_bounds = array<i64: 1>, scalar_prefetch = 0 : i64, scratch_operands = 0 : i64, tpu.core_type = #tpu.core_type<tc>, window_params = [{transform_indices = @transform_0, window_bounds = array<i64: 8, 32>}, {pipeline_mode = #tpu.pipeline_mode<synchronous>, transform_indices = @transform_1, window_bounds = array<i64: 32, 128>}, {pipeline_mode = #tpu.pipeline_mode<synchronous>, transform_indices = @transform_2, window_bounds = array<i64: 1, 128>}, {pipeline_mode = #tpu.pipeline_mode<synchronous>, transform_indices = @transform_3, window_bounds = array<i64: 128, 128>}, {pipeline_mode = #tpu.pipeline_mode<synchronous>, transform_indices = @transform_4, window_bounds = array<i64: 1, 128>}, {pipeline_mode = #tpu.pipeline_mode<synchronous>, transform_indices = @transform_5, window_bounds = array<i64: 128, 128>}, {pipeline_mode = #tpu.pipeline_mode<synchronous>, transform_indices = @transform_6, window_bounds = array<i64: 1, 128>}, {pipeline_mode = #tpu.pipeline_mode<synchronous>, transform_indices = @transform_7, window_bounds = array<i64: 128, 128>}, {pipeline_mode = #tpu.pipeline_mode<synchronous>, transform_indices = @transform_8, window_bounds = array<i64: 1, 128>}, {transform_indices = @transform_9, window_bounds = array<i64: 8, 128>}]} {
    %c0 = arith.constant 0 : index
    %c0_0 = arith.constant 0 : index
    %0 = vector.load %arg1[%c0, %c0_0] : memref<8x32xf32, #tpu.memory_space<vmem>>, vector<8x32xf32>
    %c0_1 = arith.constant 0 : index
    %c0_2 = arith.constant 0 : index
    %1 = vector.load %arg2[%c0_1, %c0_2] : memref<32x128xf32, #tpu.memory_space<vmem>>, vector<32x128xf32>
    %c0_3 = arith.constant 0 : index
    %c0_4 = arith.constant 0 : index
    %2 = vector.load %arg3[%c0_3, %c0_4] : memref<1x128xf32, #tpu.memory_space<vmem>>, vector<1x128xf32>
    %cst = arith.constant dense<0.000000e+00> : vector<8x128xf32>
    %3 = tpu.matmul %0, %1, %cst {dimension_numbers = #tpu.dot_dimension_numbers<[1], [0], [0], [1], [0, 0, 1, 1], [], []>} : vector<8x32xf32>, vector<32x128xf32>, vector<8x128xf32> -> vector<8x128xf32>
    %4 = vector.broadcast %2 : vector<1x128xf32> to vector<8x128xf32>
    %5 = arith.addf %3, %4 : vector<8x128xf32>
    %cst_5 = arith.constant 0.000000e+00 : f32
    %6 = vector.broadcast %cst_5 : f32 to vector<8x128xf32>
    %7 = arith.cmpf ogt, %5, %6 : vector<8x128xf32>
    %cst_6 = arith.constant 0.00999999977 : f32
    %8 = vector.broadcast %cst_6 : f32 to vector<8x128xf32>
    %9 = arith.mulf %8, %5 : vector<8x128xf32>
    %10 = arith.select %7, %5, %9 : vector<8x128xi1>, vector<8x128xf32>
    %c0_7 = arith.constant 0 : index
    %c0_8 = arith.constant 0 : index
    %11 = vector.load %arg4[%c0_7, %c0_8] : memref<128x128xf32, #tpu.memory_space<vmem>>, vector<128x128xf32>
    %c0_9 = arith.constant 0 : index
    %c0_10 = arith.constant 0 : index
    %12 = vector.load %arg5[%c0_9, %c0_10] : memref<1x128xf32, #tpu.memory_space<vmem>>, vector<1x128xf32>
    %cst_11 = arith.constant dense<0.000000e+00> : vector<8x128xf32>
    %13 = tpu.matmul %10, %11, %cst_11 {dimension_numbers = #tpu.dot_dimension_numbers<[1], [0], [0], [1], [0, 0, 1, 1], [], []>} : vector<8x128xf32>, vector<128x128xf32>, vector<8x128xf32> -> vector<8x128xf32>
    %14 = vector.broadcast %12 : vector<1x128xf32> to vector<8x128xf32>
    %15 = arith.addf %13, %14 : vector<8x128xf32>
    %cst_12 = arith.constant 0.000000e+00 : f32
    %16 = vector.broadcast %cst_12 : f32 to vector<8x128xf32>
    %17 = arith.cmpf ogt, %15, %16 : vector<8x128xf32>
    %cst_13 = arith.constant 0.00999999977 : f32
    %18 = vector.broadcast %cst_13 : f32 to vector<8x128xf32>
    %19 = arith.mulf %18, %15 : vector<8x128xf32>
    %20 = arith.select %17, %15, %19 : vector<8x128xi1>, vector<8x128xf32>
    %c0_14 = arith.constant 0 : index
    %c0_15 = arith.constant 0 : index
    %21 = vector.load %arg6[%c0_14, %c0_15] : memref<128x128xf32, #tpu.memory_space<vmem>>, vector<128x128xf32>
    %c0_16 = arith.constant 0 : index
    %c0_17 = arith.constant 0 : index
    %22 = vector.load %arg7[%c0_16, %c0_17] : memref<1x128xf32, #tpu.memory_space<vmem>>, vector<1x128xf32>
    %cst_18 = arith.constant dense<0.000000e+00> : vector<8x128xf32>
    %23 = tpu.matmul %20, %21, %cst_18 {dimension_numbers = #tpu.dot_dimension_numbers<[1], [0], [0], [1], [0, 0, 1, 1], [], []>} : vector<8x128xf32>, vector<128x128xf32>, vector<8x128xf32> -> vector<8x128xf32>
    %24 = vector.broadcast %22 : vector<1x128xf32> to vector<8x128xf32>
    %25 = arith.addf %23, %24 : vector<8x128xf32>
    %cst_19 = arith.constant 0.000000e+00 : f32
    %26 = vector.broadcast %cst_19 : f32 to vector<8x128xf32>
    %27 = arith.cmpf ogt, %25, %26 : vector<8x128xf32>
    %cst_20 = arith.constant 0.00999999977 : f32
    %28 = vector.broadcast %cst_20 : f32 to vector<8x128xf32>
    %29 = arith.mulf %28, %25 : vector<8x128xf32>
    %30 = arith.select %27, %25, %29 : vector<8x128xi1>, vector<8x128xf32>
    %c0_21 = arith.constant 0 : index
    %c0_22 = arith.constant 0 : index
    %31 = vector.load %arg8[%c0_21, %c0_22] : memref<128x128xf32, #tpu.memory_space<vmem>>, vector<128x128xf32>
    %c0_23 = arith.constant 0 : index
    %c0_24 = arith.constant 0 : index
    %32 = vector.load %arg9[%c0_23, %c0_24] : memref<1x128xf32, #tpu.memory_space<vmem>>, vector<1x128xf32>
    %cst_25 = arith.constant dense<0.000000e+00> : vector<8x128xf32>
    %33 = tpu.matmul %30, %31, %cst_25 {dimension_numbers = #tpu.dot_dimension_numbers<[1], [0], [0], [1], [0, 0, 1, 1], [], []>} : vector<8x128xf32>, vector<128x128xf32>, vector<8x128xf32> -> vector<8x128xf32>
    %34 = vector.broadcast %32 : vector<1x128xf32> to vector<8x128xf32>
    %35 = arith.addf %33, %34 : vector<8x128xf32>
    %c0_26 = arith.constant 0 : index
    %c0_27 = arith.constant 0 : index
    %36 = vector.load %arg10[%c0_26, %c0_27] : memref<8x128xf32, #tpu.memory_space<vmem>>, vector<8x128xf32>
    tpu.vector_store %arg10[%c0_26, %c0_27], %35 {strides = array<i32>} : memref<8x128xf32, #tpu.memory_space<vmem>>, vector<8x128xf32>,
    return
  }
  func.func @transform_0(%arg0: i32) -> (i32, i32) {
    %c0_i32 = arith.constant 0 : i32
    %c0_i32_0 = arith.constant 0 : i32
    return %arg0, %c0_i32 : i32, i32
  }
  func.func @transform_1(%arg0: i32) -> (i32, i32) {
    %c0_i32 = arith.constant 0 : i32
    %c0_i32_0 = arith.constant 0 : i32
    %c0_i32_1 = arith.constant 0 : i32
    return %c0_i32, %c0_i32_0 : i32, i32
  }
  func.func @transform_2(%arg0: i32) -> (i32, i32) {
    %c0_i32 = arith.constant 0 : i32
    %c0_i32_0 = arith.constant 0 : i32
    %c0_i32_1 = arith.constant 0 : i32
    return %c0_i32, %c0_i32_0 : i32, i32
  }
  func.func @transform_3(%arg0: i32) -> (i32, i32) {
    %c0_i32 = arith.constant 0 : i32
    %c0_i32_0 = arith.constant 0 : i32
    %c0_i32_1 = arith.constant 0 : i32
    return %c0_i32, %c0_i32_0 : i32, i32
  }
  func.func @transform_4(%arg0: i32) -> (i32, i32) {
    %c0_i32 = arith.constant 0 : i32
    %c0_i32_0 = arith.constant 0 : i32
    %c0_i32_1 = arith.constant 0 : i32
    return %c0_i32, %c0_i32_0 : i32, i32
  }
  func.func @transform_5(%arg0: i32) -> (i32, i32) {
    %c0_i32 = arith.constant 0 : i32
    %c0_i32_0 = arith.constant 0 : i32
    %c0_i32_1 = arith.constant 0 : i32
    return %c0_i32, %c0_i32_0 : i32, i32
  }
  func.func @transform_6(%arg0: i32) -> (i32, i32) {
    %c0_i32 = arith.constant 0 : i32
    %c0_i32_0 = arith.constant 0 : i32
    %c0_i32_1 = arith.constant 0 : i32
    return %c0_i32, %c0_i32_0 : i32, i32
  }
  func.func @transform_7(%arg0: i32) -> (i32, i32) {
    %c0_i32 = arith.constant 0 : i32
    %c0_i32_0 = arith.constant 0 : i32
    %c0_i32_1 = arith.constant 0 : i32
    return %c0_i32, %c0_i32_0 : i32, i32
  }
  func.func @transform_8(%arg0: i32) -> (i32, i32) {
    %c0_i32 = arith.constant 0 : i32
    %c0_i32_0 = arith.constant 0 : i32
    %c0_i32_1 = arith.constant 0 : i32
    return %c0_i32, %c0_i32_0 : i32, i32
  }
  func.func @transform_9(%arg0: i32) -> (i32, i32) {
    %c0_i32 = arith.constant 0 : i32
    %c0_i32_0 = arith.constant 0 : i32
    return %arg0, %c0_i32 : i32, i32
  }
}

module attributes {stable_mosaic.version = 11 : i64} {
  func.func @_fused_mlp_kernel(%arg0: i32, %arg1: memref<8x32xf32, #tpu.memory_space<vmem>>, %arg2: memref<32x128xf32, #tpu.memory_space<vmem>>, %arg3: memref<1x128xf32, #tpu.memory_space<vmem>>, %arg4: memref<128x128xf32, #tpu.memory_space<vmem>>, %arg5: memref<1x128xf32, #tpu.memory_space<vmem>>, %arg6: memref<128x128xf32, #tpu.memory_space<vmem>>, %arg7: memref<1x128xf32, #tpu.memory_space<vmem>>, %arg8: memref<128x128xf32, #tpu.memory_space<vmem>>, %arg9: memref<1x128xf32, #tpu.memory_space<vmem>>, %arg10: memref<8x128xf32, #tpu.memory_space<vmem>>) attributes {dimension_semantics = [#tpu.dimension_semantics<parallel>], iteration_bounds = array<i64: 1>, scalar_prefetch = 0 : i64, scratch_operands = 0 : i64, tpu.core_type = #tpu.core_type<tc>, window_params = [{transform_indices = @transform_0, window_bounds = array<i64: 8, 32>}, {pipeline_mode = #tpu.pipeline_mode<synchronous>, transform_indices = @transform_1, window_bounds = array<i64: 32, 128>}, {pipeline_mode = #tpu.pipeline_mode<synchronous>, transform_indices = @transform_2, window_bounds = array<i64: 1, 128>}, {pipeline_mode = #tpu.pipeline_mode<synchronous>, transform_indices = @transform_3, window_bounds = array<i64: 128, 128>}, {pipeline_mode = #tpu.pipeline_mode<synchronous>, transform_indices = @transform_4, window_bounds = array<i64: 1, 128>}, {pipeline_mode = #tpu.pipeline_mode<synchronous>, transform_indices = @transform_5, window_bounds = array<i64: 128, 128>}, {pipeline_mode = #tpu.pipeline_mode<synchronous>, transform_indices = @transform_6, window_bounds = array<i64: 1, 128>}, {pipeline_mode = #tpu.pipeline_mode<synchronous>, transform_indices = @transform_7, window_bounds = array<i64: 128, 128>}, {pipeline_mode = #tpu.pipeline_mode<synchronous>, transform_indices = @transform_8, window_bounds = array<i64: 1, 128>}, {transform_indices = @transform_9, window_bounds = array<i64: 8, 128>}]} {
    %c0 = arith.constant 0 : index
    %c0_0 = arith.constant 0 : index
    %0 = vector.load %arg1[%c0, %c0_0] : memref<8x32xf32, #tpu.memory_space<vmem>>, vector<8x32xf32>
    %c0_1 = arith.constant 0 : index
    %c0_2 = arith.constant 0 : index
    %1 = vector.load %arg2[%c0_1, %c0_2] : memref<32x128xf32, #tpu.memory_space<vmem>>, vector<32x128xf32>
    %c0_3 = arith.constant 0 : index
    %c0_4 = arith.constant 0 : index
    %2 = vector.load %arg3[%c0_3, %c0_4] : memref<1x128xf32, #tpu.memory_space<vmem>>, vector<1x128xf32>
    %cst = arith.constant dense<0.000000e+00> : vector<8x128xf32>
    %3 = tpu.matmul %0, %1, %cst {dimension_numbers = #tpu.dot_dimension_numbers<[1], [0], [0], [1], [0, 0, 1, 1], [], []>} : vector<8x32xf32>, vector<32x128xf32>, vector<8x128xf32> -> vector<8x128xf32>
    %4 = vector.broadcast %2 : vector<1x128xf32> to vector<8x128xf32>
    %5 = arith.addf %3, %4 : vector<8x128xf32>
    %cst_5 = arith.constant 0.000000e+00 : f32
    %6 = vector.broadcast %cst_5 : f32 to vector<8x128xf32>
    %7 = arith.cmpf ogt, %5, %6 : vector<8x128xf32>
    %cst_6 = arith.constant 0.00999999977 : f32
    %8 = vector.broadcast %cst_6 : f32 to vector<8x128xf32>
    %9 = arith.mulf %8, %5 : vector<8x128xf32>
    %10 = arith.select %7, %5, %9 : vector<8x128xi1>, vector<8x128xf32>
    %c0_7 = arith.constant 0 : index
    %c0_8 = arith.constant 0 : index
    %11 = vector.load %arg4[%c0_7, %c0_8] : memref<128x128xf32, #tpu.memory_space<vmem>>, vector<128x128xf32>
    %c0_9 = arith.constant 0 : index
    %c0_10 = arith.constant 0 : index
    %12 = vector.load %arg5[%c0_9, %c0_10] : memref<1x128xf32, #tpu.memory_space<vmem>>, vector<1x128xf32>
    %cst_11 = arith.constant dense<0.000000e+00> : vector<8x128xf32>
    %13 = tpu.matmul %10, %11, %cst_11 {dimension_numbers = #tpu.dot_dimension_numbers<[1], [0], [0], [1], [0, 0, 1, 1], [], []>} : vector<8x128xf32>, vector<128x128xf32>, vector<8x128xf32> -> vector<8x128xf32>
    %14 = vector.broadcast %12 : vector<1x128xf32> to vector<8x128xf32>
    %15 = arith.addf %13, %14 : vector<8x128xf32>
    %cst_12 = arith.constant 0.000000e+00 : f32
    %16 = vector.broadcast %cst_12 : f32 to vector<8x128xf32>
    %17 = arith.cmpf ogt, %15, %16 : vector<8x128xf32>
    %cst_13 = arith.constant 0.00999999977 : f32
    %18 = vector.broadcast %cst_13 : f32 to vector<8x128xf32>
    %19 = arith.mulf %18, %15 : vector<8x128xf32>
    %20 = arith.select %17, %15, %19 : vector<8x128xi1>, vector<8x128xf32>
    %c0_14 = arith.constant 0 : index
    %c0_15 = arith.constant 0 : index
    %21 = vector.load %arg6[%c0_14, %c0_15] : memref<128x128xf32, #tpu.memory_space<vmem>>, vector<128x128xf32>
    %c0_16 = arith.constant 0 : index
    %c0_17 = arith.constant 0 : index
    %22 = vector.load %arg7[%c0_16, %c0_17] : memref<1x128xf32, #tpu.memory_space<vmem>>, vector<1x128xf32>
    %cst_18 = arith.constant dense<0.000000e+00> : vector<8x128xf32>
    %23 = tpu.matmul %20, %21, %cst_18 {dimension_numbers = #tpu.dot_dimension_numbers<[1], [0], [0], [1], [0, 0, 1, 1], [], []>} : vector<8x128xf32>, vector<128x128xf32>, vector<8x128xf32> -> vector<8x128xf32>
    %24 = vector.broadcast %22 : vector<1x128xf32> to vector<8x128xf32>
    %25 = arith.addf %23, %24 : vector<8x128xf32>
    %cst_19 = arith.constant 0.000000e+00 : f32
    %26 = vector.broadcast %cst_19 : f32 to vector<8x128xf32>
    %27 = arith.cmpf ogt, %25, %26 : vector<8x128xf32>
    %cst_20 = arith.constant 0.00999999977 : f32
    %28 = vector.broadcast %cst_20 : f32 to vector<8x128xf32>
    %29 = arith.mulf %28, %25 : vector<8x128xf32>
    %30 = arith.select %27, %25, %29 : vector<8x128xi1>, vector<8x128xf32>
    %c0_21 = arith.constant 0 : index
    %c0_22 = arith.constant 0 : index
    %31 = vector.load %arg8[%c0_21, %c0_22] : memref<128x128xf32, #tpu.memory_space<vmem>>, vector<128x128xf32>
    %c0_23 = arith.constant 0 : index
    %c0_24 = arith.constant 0 : index
    %32 = vector.load %arg9[%c0_23, %c0_24] : memref<1x128xf32, #tpu.memory_space<vmem>>, vector<1x128xf32>
    %cst_25 = arith.constant dense<0.000000e+00> : vector<8x128xf32>
    %33 = tpu.matmul %30, %31, %cst_25 {dimension_numbers = #tpu.dot_dimension_numbers<[1], [0], [0], [1], [0, 0, 1, 1], [], []>} : vector<8x128xf32>, vector<128x128xf32>, vector<8x128xf32> -> vector<8x128xf32>
    %34 = vector.broadcast %32 : vector<1x128xf32> to vector<8x128xf32>
    %35 = arith.addf %33, %34 : vector<8x128xf32>
    %c0_26 = arith.constant 0 : index
    %c0_27 = arith.constant 0 : index
    %36 = vector.load %arg10[%c0_26, %c0_27] : memref<8x128xf32, #tpu.memory_space<vmem>>, vector<8x128xf32>
    tpu.vector_store %arg10[%c0_26, %c0_27], %35 {strides = array<i32>} : memref<8x128xf32, #tpu.memory_space<vmem>>, vector<8x128xf32>,
    return
  }
  func.func @transform_0(%arg0: i32) -> (i32, i32) {
    %c0_i32 = arith.constant 0 : i32
    %c0_i32_0 = arith.constant 0 : i32
    return %arg0, %c0_i32 : i32, i32
  }
  func.func @transform_1(%arg0: i32) -> (i32, i32) {
    %c0_i32 = arith.constant 0 : i32
    %c0_i32_0 = arith.constant 0 : i32
    %c0_i32_1 = arith.constant 0 : i32
    return %c0_i32, %c0_i32_0 : i32, i32
  }
  func.func @transform_2(%arg0: i32) -> (i32, i32) {
    %c0_i32 = arith.constant 0 : i32
    %c0_i32_0 = arith.constant 0 : i32
    %c0_i32_1 = arith.constant 0 : i32
    return %c0_i32, %c0_i32_0 : i32, i32
  }
  func.func @transform_3(%arg0: i32) -> (i32, i32) {
    %c0_i32 = arith.constant 0 : i32
    %c0_i32_0 = arith.constant 0 : i32
    %c0_i32_1 = arith.constant 0 : i32
    return %c0_i32, %c0_i32_0 : i32, i32
  }
  func.func @transform_4(%arg0: i32) -> (i32, i32) {
    %c0_i32 = arith.constant 0 : i32
    %c0_i32_0 = arith.constant 0 : i32
    %c0_i32_1 = arith.constant 0 : i32
    return %c0_i32, %c0_i32_0 : i32, i32
  }
  func.func @transform_5(%arg0: i32) -> (i32, i32) {
    %c0_i32 = arith.constant 0 : i32
    %c0_i32_0 = arith.constant 0 : i32
    %c0_i32_1 = arith.constant 0 : i32
    return %c0_i32, %c0_i32_0 : i32, i32
  }
  func.func @transform_6(%arg0: i32) -> (i32, i32) {
    %c0_i32 = arith.constant 0 : i32
    %c0_i32_0 = arith.constant 0 : i32
    %c0_i32_1 = arith.constant 0 : i32
    return %c0_i32, %c0_i32_0 : i32, i32
  }
  func.func @transform_7(%arg0: i32) -> (i32, i32) {
    %c0_i32 = arith.constant 0 : i32
    %c0_i32_0 = arith.constant 0 : i32
    %c0_i32_1 = arith.constant 0 : i32
    return %c0_i32, %c0_i32_0 : i32, i32
  }
  func.func @transform_8(%arg0: i32) -> (i32, i32) {
    %c0_i32 = arith.constant 0 : i32
    %c0_i32_0 = arith.constant 0 : i32
    %c0_i32_1 = arith.constant 0 : i32
    return %c0_i32, %c0_i32_0 : i32, i32
  }
  func.func @transform_9(%arg0: i32) -> (i32, i32) {
    %c0_i32 = arith.constant 0 : i32
    %c0_i32_0 = arith.constant 0 : i32
    return %arg0, %c0_i32 : i32, i32
  }
}

</mosaic_0001>

<llo_original>
// kernel: tpu_custom_call.1
$region0: #{tpu_custom_call.1}
  #allocation0 [shape = 'u32[]', space=smem, size = 0x4, offset = 0x4, fixed_abs, tag = 'smem constant byte address 0x4 - core index']
  #allocation1 [shape = 'u32[144,128]{1,0:T(1,128)}', space=vmem, size = 0x12000, scoped, tag = 'internal scratch']
  %s0 = inlined_call_operand.hbm [shape: f32[8,32], index: 0, kind: input, shape index: {}]
  %s1 = inlined_call_operand.hbm [shape: f32[32,128], index: 1, kind: input, shape index: {}]
  %s2 = inlined_call_operand.vmem [shape: f32[1,128], index: 2, kind: input, shape index: {}]
  %s3 = inlined_call_operand.hbm [shape: f32[128,128], index: 3, kind: input, shape index: {}]
  %s4 = inlined_call_operand.vmem [shape: f32[1,128], index: 4, kind: input, shape index: {}]
  %s5 = inlined_call_operand.hbm [shape: f32[128,128], index: 5, kind: input, shape index: {}]
  %s6 = inlined_call_operand.vmem [shape: f32[1,128], index: 6, kind: input, shape index: {}]
  %s7 = inlined_call_operand.hbm [shape: f32[128,128], index: 7, kind: input, shape index: {}]
  %s8 = inlined_call_operand.vmem [shape: f32[1,128], index: 8, kind: input, shape index: {}]
  %s9 = inlined_call_operand.hbm [shape: f32[8,128], index: 9, kind: output, shape index: {}]
  %s10 = sld [smem:[#allocation0]]
  $region66: #{tpu_custom_call.1} parent=0
    _
  %s12 = ssub.s32 1, %s10
  %s13 = scalar_select 0, %s12, %s10
  $region1: #{tpu_custom_call.1} parent=0
    #allocation2 [shape = 'u8[4096]{0}', space=vmem, size = 0x1000, scoped, tag = 'input window, operand 0, single buffered']
    #allocation3 [shape = 's32[1]{0}', space=sflag, size = 0x4, scoped, tag = 'scoped memory for tpu_custom_call.1']
    #allocation4 [shape = 's32[1]{0}', space=sflag, size = 0x4, scoped, tag = 'scoped memory for tpu_custom_call.1']
    #allocation5 [shape = 'u8[16384]{0}', space=vmem, size = 0x4000, scoped, tag = 'input window, operand 1, single buffered']
    #allocation6 [shape = 's32[1]{0}', space=sflag, size = 0x4, scoped, tag = 'scoped memory for tpu_custom_call.1']
    #allocation7 [shape = 'u8[65536]{0}', space=vmem, size = 0x10000, scoped, tag = 'input window, operand 3, single buffered']
    #allocation8 [shape = 'u8[65536]{0}', space=vmem, size = 0x10000, scoped, tag = 'input window, operand 5, single buffered']
    #allocation9 [shape = 's32[1]{0}', space=sflag, size = 0x4, scoped, tag = 'scoped memory for tpu_custom_call.1']
    #allocation10 [shape = 'u8[65536]{0}', space=vmem, size = 0x10000, scoped, tag = 'input window, operand 7, single buffered']
    #allocation11 [shape = 'u8[4096]{0}', space=vmem, size = 0x1000, scoped, tag = 'output window, operand 0, single buffered']
    %14 = vsyncpa [#allocation3], 0
    %15 = vsyncpa [#allocation6], 0
    %16 = vsyncpa [#allocation9], 0
    %17 = vsyncpa [#allocation4], 0
    // Predicated region
    $region2: #{tpu_custom_call.1} parent=1 // pred_check
      _
    $region3: #{tpu_custom_call.1} parent=1 // pred_check_branch
      %19 = sbr.rel (0) target = $region5
    $region4: #{tpu_custom_call.1} parent=1 // pred_region
      %s21 = ssub.s32 128, 128
      %22 = vsyncadd [#allocation3], %s21
      %s24 = sshll.u32 [#allocation2], 4
      %s25 = int_to_ptr.vmem [resolvable:$true] %s24
      %27 = dma.hbm_to_vmem [thread:$0]  %s0, 128, %s25, [#allocation3]
    $region5: #{tpu_custom_call.1} parent=1 // pred_fallthru
      _
    // Predicated region
    $region6: #{tpu_custom_call.1} parent=1 // pred_check
      _
    $region7: #{tpu_custom_call.1} parent=1 // pred_check_branch
      %29 = sbr.rel (0) target = $region9
    $region8: #{tpu_custom_call.1} parent=1 // pred_region
      %s31 = ssub.s32 512, 512
      %32 = vsyncadd [#allocation6], %s31
      %s33 = sshll.u32 [#allocation5], 4
      %s34 = int_to_ptr.vmem [resolvable:$true] %s33
      %39 = dma.hbm_to_vmem [thread:$0]  %s1, 512, %s34, [#allocation6], 128, 128, 8
    $region9: #{tpu_custom_call.1} parent=1 // pred_fallthru
      _
    // Predicated region
    $region10: #{tpu_custom_call.1} parent=1 // pred_check
      _
    $region11: #{tpu_custom_call.1} parent=1 // pred_check_branch
      %41 = sbr.rel (0) target = $region13
    $region12: #{tpu_custom_call.1} parent=1 // pred_region
      _
    $region13: #{tpu_custom_call.1} parent=1 // pred_fallthru
      _
    // Predicated region
    $region14: #{tpu_custom_call.1} parent=1 // pred_check
      _
    $region15: #{tpu_custom_call.1} parent=1 // pred_check_branch
      %43 = sbr.rel (0) target = $region17
    $region16: #{tpu_custom_call.1} parent=1 // pred_region
      %s45 = ssub.s32 2048, 2048
      %46 = vsyncadd [#allocation6], %s45
      %s47 = sshll.u32 [#allocation7], 4
      %s48 = int_to_ptr.vmem [resolvable:$true] %s47
      %53 = dma.hbm_to_vmem [thread:$0]  %s3, 2048, %s48, [#allocation6], 128, 128, 8
    $region17: #{tpu_custom_call.1} parent=1 // pred_fallthru
      _
    // Predicated region
    $region18: #{tpu_custom_call.1} parent=1 // pred_check
      _
    $region19: #{tpu_custom_call.1} parent=1 // pred_check_branch
      %55 = sbr.rel (0) target = $region21
    $region20: #{tpu_custom_call.1} parent=1 // pred_region
      _
    $region21: #{tpu_custom_call.1} parent=1 // pred_fallthru
      _
    // Predicated region
    $region22: #{tpu_custom_call.1} parent=1 // pred_check
      _
    $region23: #{tpu_custom_call.1} parent=1 // pred_check_branch
      %57 = sbr.rel (0) target = $region25
    $region24: #{tpu_custom_call.1} parent=1 // pred_region
      %s59 = ssub.s32 2048, 2048
      %60 = vsyncadd [#allocation9], %s59
      %s61 = sshll.u32 [#allocation8], 4
      %s62 = int_to_ptr.vmem [resolvable:$true] %s61
      %67 = dma.hbm_to_vmem [thread:$0]  %s5, 2048, %s62, [#allocation9], 128, 128, 8
    $region25: #{tpu_custom_call.1} parent=1 // pred_fallthru
      _
    // Predicated region
    $region26: #{tpu_custom_call.1} parent=1 // pred_check
      _
    $region27: #{tpu_custom_call.1} parent=1 // pred_check_branch
      %69 = sbr.rel (0) target = $region29
    $region28: #{tpu_custom_call.1} parent=1 // pred_region
      _
    $region29: #{tpu_custom_call.1} parent=1 // pred_fallthru
      _
    // Predicated region
    $region30: #{tpu_custom_call.1} parent=1 // pred_check
      _
    $region31: #{tpu_custom_call.1} parent=1 // pred_check_branch
      %71 = sbr.rel (0) target = $region33
    $region32: #{tpu_custom_call.1} parent=1 // pred_region
      %s73 = ssub.s32 2048, 2048
      %74 = vsyncadd [#allocation9], %s73
      %s75 = sshll.u32 [#allocation10], 4
      %s76 = int_to_ptr.vmem [resolvable:$true] %s75
      %81 = dma.hbm_to_vmem [thread:$0]  %s7, 2048, %s76, [#allocation9], 128, 128, 8
    $region33: #{tpu_custom_call.1} parent=1 // pred_fallthru
      _
    // Predicated region
    $region34: #{tpu_custom_call.1} parent=1 // pred_check
      _
    $region35: #{tpu_custom_call.1} parent=1 // pred_check_branch
      %83 = sbr.rel (0) target = $region37
    $region36: #{tpu_custom_call.1} parent=1 // pred_region
      _
    $region37: #{tpu_custom_call.1} parent=1 // pred_fallthru
      _
    // Predicated region
    $region38: #{tpu_custom_call.1} parent=1 // pred_check
      _
    $region39: #{tpu_custom_call.1} parent=1 // pred_check_branch
      %85 = sbr.rel (0) target = $region41
    $region40: #{tpu_custom_call.1} parent=1 // pred_region
      %86 = dma.done [#allocation3], 128
    $region41: #{tpu_custom_call.1} parent=1 // pred_fallthru
      _
    // Predicated region
    $region42: #{tpu_custom_call.1} parent=1 // pred_check
      _
    $region43: #{tpu_custom_call.1} parent=1 // pred_check_branch
      %88 = sbr.rel (0) target = $region45
    $region44: #{tpu_custom_call.1} parent=1 // pred_region
      %89 = dma.done [#allocation6], 512
    $region45: #{tpu_custom_call.1} parent=1 // pred_fallthru
      _
    // Predicated region
    $region46: #{tpu_custom_call.1} parent=1 // pred_check
      _
    $region47: #{tpu_custom_call.1} parent=1 // pred_check_branch
      %91 = sbr.rel (0) target = $region49
    $region48: #{tpu_custom_call.1} parent=1 // pred_region
      %92 = dma.done [#allocation6], 2048
    $region49: #{tpu_custom_call.1} parent=1 // pred_fallthru
      _
    // Predicated region
    $region50: #{tpu_custom_call.1} parent=1 // pred_check
      _
    $region51: #{tpu_custom_call.1} parent=1 // pred_check_branch
      %94 = sbr.rel (0) target = $region53
    $region52: #{tpu_custom_call.1} parent=1 // pred_region
      %95 = dma.done [#allocation9], 2048
    $region53: #{tpu_custom_call.1} parent=1 // pred_fallthru
      _
    // Predicated region
    $region54: #{tpu_custom_call.1} parent=1 // pred_check
      _
    $region55: #{tpu_custom_call.1} parent=1 // pred_check_branch
      %97 = sbr.rel (0) target = $region57
    $region56: #{tpu_custom_call.1} parent=1 // pred_region
      %98 = dma.done [#allocation9], 2048
    $region57: #{tpu_custom_call.1} parent=1 // pred_fallthru
      _
    %v99 = vld [vmem:[#allocation2] sm:$0xff]
    %v100 = vld [vmem:[#allocation5] sm:$0xff]
    %v101 = vld [vmem:[#allocation5 + $0x8] sm:$0xff]
    %v102 = vld [vmem:[#allocation5 + $0x10] sm:$0xff]
    %v103 = vld [vmem:[#allocation5 + $0x18] sm:$0xff]
    %v104 = vld [vmem:[%s2] sm:$0x1]
    %v106 = vlaneseq
    %v107 = vshrl.u32 %v106, 7
    %v108 = vsub.s32 0, %v107
    %v109 = vrot.slane %v104, %v108
    %vm111 = vcmask 261120
    %v113 = vsel %vm111, %v99, 0
    %115 = vmatprep.subr.mxu0 0.0
    %116 = vmatpush1.msra.mxu0 %v100
    %117 = vmatprep.subr.mxu0 0.0
    %118 = vmatpush1.msra.mxu0 %v101
    %119 = vmatprep.subr.mxu0 0.0
    %120 = vmatpush1.msra.mxu0 %v102
    %121 = vmatprep.subr.mxu0 0.0
    %122 = vmatpush1.msra.mxu0 %v103
    %123 = vmatprep.subr.mxu0 0.0
    %124 = vmatpush1.msra.mxu0 0.0
    %125 = vmatprep.subr.mxu0 0.0
    %126 = vmatpush1.msra.mxu0 0.0
    %127 = vmatprep.subr.mxu0 0.0
    %128 = vmatpush1.msra.mxu0 0.0
    %129 = vmatprep.subr.mxu0 0.0
    %130 = vmatpush1.msra.mxu0 0.0
    %131 = vmatprep.subr.mxu0 0.0
    %132 = vmatpush1.msra.mxu0 0.0
    %133 = vmatprep.subr.mxu0 0.0
    %134 = vmatpush1.msra.mxu0 0.0
    %135 = vmatprep.subr.mxu0 0.0
    %136 = vmatpush1.msra.mxu0 0.0
    %137 = vmatprep.subr.mxu0 0.0
    %138 = vmatpush1.msra.mxu0 0.0
    %139 = vmatprep.subr.mxu0 0.0
    %140 = vmatpush1.msra.mxu0 0.0
    %141 = vmatprep.subr.mxu0 0.0
    %142 = vmatpush1.msra.mxu0 0.0
    %143 = vmatprep.subr.mxu0 0.0
    %144 = vmatpush1.msra.mxu0 0.0
    %145 = vmatprep.subr.mxu0 0.0
    %146 = vmatpush1.msra.mxu0 0.0
    %147 = vmatprep.subr.mxu0 0.0
    %148 = vmatpush1.msra.mxu0 0.0
    %149 = vmatprep.subr.mxu0 0.0
    %150 = vmatpush1.msra.mxu0 0.0
    %151 = vmatprep.subr.mxu0 0.0
    %152 = vmatpush1.msra.mxu0 0.0
    %153 = vmatprep.subr.mxu0 0.0
    %154 = vmatpush1.msra.mxu0 0.0
    %155 = vmatprep.subr.mxu0 0.0
    %156 = vmatpush1.msra.mxu0 0.0
    %157 = vmatprep.subr.mxu0 0.0
    %158 = vmatpush1.msra.mxu0 0.0
    %159 = vmatprep.subr.mxu0 0.0
    %160 = vmatpush1.msra.mxu0 0.0
    %161 = vmatprep.subr.mxu0 0.0
    %162 = vmatpush1.msra.mxu0 0.0
    %163 = vmatprep.subr.mxu0 0.0
    %164 = vmatpush1.msra.mxu0 0.0
    %165 = vmatprep.subr.mxu0 0.0
    %166 = vmatpush1.msra.mxu0 0.0
    %167 = vmatprep.subr.mxu0 0.0
    %168 = vmatpush1.msra.mxu0 0.0
    %169 = vmatprep.subr.mxu0 0.0
    %170 = vmatpush1.msra.mxu0 0.0
    %171 = vmatprep.subr.mxu0 0.0
    %172 = vmatpush1.msra.mxu0 0.0
    %173 = vmatprep.subr.mxu0 0.0
    %174 = vmatpush1.msra.mxu0 0.0
    %175 = vmatprep.subr.mxu0 0.0
    %176 = vmatpush1.msra.mxu0 0.0
    %177 = vmatprep.subr.mxu0 0.0
    %178 = vmatpush1.msra.mxu0 0.0
    %179 = vmatprep.mubr.f32.mxu0 0.0
    %180 = vmatmul.mubr.f32.gmra.mrb[0].mxu0 %v113
    %v181 = vpop.f32.mrb[0].mxu0
    %v182 = vadd.f32 %v109, %v181
    %v183 = vpop.f32.mrb[0].mxu0
    %184 = vdwg.mxu0
    %vm185 = vcmp.gt.f32.partialorder %v182, 0.0
    %v186 = vmul.f32 %v182, 0.01
    %v187 = vsel %vm185, %v182, %v186
    %v188 = vld [vmem:[#allocation7] sm:$0xff]
    %v189 = vld [vmem:[#allocation7 + $0x8] sm:$0xff]
    %v190 = vld [vmem:[#allocation7 + $0x10] sm:$0xff]
    %v191 = vld [vmem:[#allocation7 + $0x18] sm:$0xff]
    %v192 = vld [vmem:[#allocation7 + $0x20] sm:$0xff]
    %v193 = vld [vmem:[#allocation7 + $0x28] sm:$0xff]
    %v194 = vld [vmem:[#allocation7 + $0x30] sm:$0xff]
    %v195 = vld [vmem:[#allocation7 + $0x38] sm:$0xff]
    %v196 = vld [vmem:[#allocation7 + $0x40] sm:$0xff]
    %v197 = vld [vmem:[#allocation7 + $0x48] sm:$0xff]
    %v198 = vld [vmem:[#allocation7 + $0x50] sm:$0xff]
    %v199 = vld [vmem:[#allocation7 + $0x58] sm:$0xff]
    %v200 = vld [vmem:[#allocation7 + $0x60] sm:$0xff]
    %v201 = vld [vmem:[#allocation7 + $0x68] sm:$0xff]
    %v202 = vld [vmem:[#allocation7 + $0x70] sm:$0xff]
    %v203 = vld [vmem:[#allocation7 + $0x78] sm:$0xff]
    %v204 = vld [vmem:[%s4] sm:$0x1]
    %v206 = vlaneseq
    %v207 = vshrl.u32 %v206, 7
    %v208 = vsub.s32 0, %v207
    %v209 = vrot.slane %v204, %v208
    %211 = vmatprep.subr.mxu0 0.0
    %212 = vmatpush1.msra.mxu0 %v188
    %213 = vmatprep.subr.mxu0 0.0
    %214 = vmatpush1.msra.mxu0 %v189
    %215 = vmatprep.subr.mxu0 0.0
    %216 = vmatpush1.msra.mxu0 %v190
    %217 = vmatprep.subr.mxu0 0.0
    %218 = vmatpush1.msra.mxu0 %v191
    %219 = vmatprep.subr.mxu0 0.0
    %220 = vmatpush1.msra.mxu0 %v192
    %221 = vmatprep.subr.mxu0 0.0
    %222 = vmatpush1.msra.mxu0 %v193
    %223 = vmatprep.subr.mxu0 0.0
    %224 = vmatpush1.msra.mxu0 %v194
    %225 = vmatprep.subr.mxu0 0.0
    %226 = vmatpush1.msra.mxu0 %v195
    %227 = vmatprep.subr.mxu0 0.0
    %228 = vmatpush1.msra.mxu0 %v196
    %229 = vmatprep.subr.mxu0 0.0
    %230 = vmatpush1.msra.mxu0 %v197
    %231 = vmatprep.subr.mxu0 0.0
    %232 = vmatpush1.msra.mxu0 %v198
    %233 = vmatprep.subr.mxu0 0.0
    %234 = vmatpush1.msra.mxu0 %v199
    %235 = vmatprep.subr.mxu0 0.0
    %236 = vmatpush1.msra.mxu0 %v200
    %237 = vmatprep.subr.mxu0 0.0
    %238 = vmatpush1.msra.mxu0 %v201
    %239 = vmatprep.subr.mxu0 0.0
    %240 = vmatpush1.msra.mxu0 %v202
    %241 = vmatprep.subr.mxu0 0.0
    %242 = vmatpush1.msra.mxu0 %v203
    %243 = vmatprep.subr.mxu0 0.0
    %244 = vmatpush1.msra.mxu0 0.0
    %245 = vmatprep.subr.mxu0 0.0
    %246 = vmatpush1.msra.mxu0 0.0
    %247 = vmatprep.subr.mxu0 0.0
    %248 = vmatpush1.msra.mxu0 0.0
    %249 = vmatprep.subr.mxu0 0.0
    %250 = vmatpush1.msra.mxu0 0.0
    %251 = vmatprep.subr.mxu0 0.0
    %252 = vmatpush1.msra.mxu0 0.0
    %253 = vmatprep.subr.mxu0 0.0
    %254 = vmatpush1.msra.mxu0 0.0
    %255 = vmatprep.subr.mxu0 0.0
    %256 = vmatpush1.msra.mxu0 0.0
    %257 = vmatprep.subr.mxu0 0.0
    %258 = vmatpush1.msra.mxu0 0.0
    %259 = vmatprep.subr.mxu0 0.0
    %260 = vmatpush1.msra.mxu0 0.0
    %261 = vmatprep.subr.mxu0 0.0
    %262 = vmatpush1.msra.mxu0 0.0
    %263 = vmatprep.subr.mxu0 0.0
    %264 = vmatpush1.msra.mxu0 0.0
    %265 = vmatprep.subr.mxu0 0.0
    %266 = vmatpush1.msra.mxu0 0.0
    %267 = vmatprep.subr.mxu0 0.0
    %268 = vmatpush1.msra.mxu0 0.0
    %269 = vmatprep.subr.mxu0 0.0
    %270 = vmatpush1.msra.mxu0 0.0
    %271 = vmatprep.subr.mxu0 0.0
    %272 = vmatpush1.msra.mxu0 0.0
    %273 = vmatprep.subr.mxu0 0.0
    %274 = vmatpush1.msra.mxu0 0.0
    %275 = vmatprep.mubr.f32.mxu0 0.0
    %276 = vmatmul.mubr.f32.gmra.mrb[0].mxu0 %v187
    %v277 = vpop.f32.mrb[0].mxu0
    %v278 = vadd.f32 %v209, %v277
    %v279 = vpop.f32.mrb[0].mxu0
    %280 = vdwg.mxu0
    %vm281 = vcmp.gt.f32.partialorder %v278, 0.0
    %v282 = vmul.f32 %v278, 0.01
    %v283 = vsel %vm281, %v278, %v282
    %v284 = vld [vmem:[#allocation8] sm:$0xff]
    %v285 = vld [vmem:[#allocation8 + $0x8] sm:$0xff]
    %v286 = vld [vmem:[#allocation8 + $0x10] sm:$0xff]
    %v287 = vld [vmem:[#allocation8 + $0x18] sm:$0xff]
    %v288 = vld [vmem:[#allocation8 + $0x20] sm:$0xff]
    %v289 = vld [vmem:[#allocation8 + $0x28] sm:$0xff]
    %v290 = vld [vmem:[#allocation8 + $0x30] sm:$0xff]
    %v291 = vld [vmem:[#allocation8 + $0x38] sm:$0xff]
    %v292 = vld [vmem:[#allocation8 + $0x40] sm:$0xff]
    %v293 = vld [vmem:[#allocation8 + $0x48] sm:$0xff]
    %v294 = vld [vmem:[#allocation8 + $0x50] sm:$0xff]
    %v295 = vld [vmem:[#allocation8 + $0x58] sm:$0xff]
    %v296 = vld [vmem:[#allocation8 + $0x60] sm:$0xff]
    %v297 = vld [vmem:[#allocation8 + $0x68] sm:$0xff]
    %v298 = vld [vmem:[#allocation8 + $0x70] sm:$0xff]
    %v299 = vld [vmem:[#allocation8 + $0x78] sm:$0xff]
    %v300 = vld [vmem:[%s6] sm:$0x1]
    %v302 = vlaneseq
    %v303 = vshrl.u32 %v302, 7
    %v304 = vsub.s32 0, %v303
    %v305 = vrot.slane %v300, %v304
    %307 = vmatprep.subr.mxu0 0.0
    %308 = vmatpush1.msra.mxu0 %v284
    %309 = vmatprep.subr.mxu0 0.0
    %310 = vmatpush1.msra.mxu0 %v285
    %311 = vmatprep.subr.mxu0 0.0
    %312 = vmatpush1.msra.mxu0 %v286
    %313 = vmatprep.subr.mxu0 0.0
    %314 = vmatpush1.msra.mxu0 %v287
    %315 = vmatprep.subr.mxu0 0.0
    %316 = vmatpush1.msra.mxu0 %v288
    %317 = vmatprep.subr.mxu0 0.0
    %318 = vmatpush1.msra.mxu0 %v289
    %319 = vmatprep.subr.mxu0 0.0
    %320 = vmatpush1.msra.mxu0 %v290
    %321 = vmatprep.subr.mxu0 0.0
    %322 = vmatpush1.msra.mxu0 %v291
    %323 = vmatprep.subr.mxu0 0.0
    %324 = vmatpush1.msra.mxu0 %v292
    %325 = vmatprep.subr.mxu0 0.0
    %326 = vmatpush1.msra.mxu0 %v293
    %327 = vmatprep.subr.mxu0 0.0
    %328 = vmatpush1.msra.mxu0 %v294
    %329 = vmatprep.subr.mxu0 0.0
    %330 = vmatpush1.msra.mxu0 %v295
    %331 = vmatprep.subr.mxu0 0.0
    %332 = vmatpush1.msra.mxu0 %v296
    %333 = vmatprep.subr.mxu0 0.0
    %334 = vmatpush1.msra.mxu0 %v297
    %335 = vmatprep.subr.mxu0 0.0
    %336 = vmatpush1.msra.mxu0 %v298
    %337 = vmatprep.subr.mxu0 0.0
    %338 = vmatpush1.msra.mxu0 %v299
    %339 = vmatprep.subr.mxu0 0.0
    %340 = vmatpush1.msra.mxu0 0.0
    %341 = vmatprep.subr.mxu0 0.0
    %342 = vmatpush1.msra.mxu0 0.0
    %343 = vmatprep.subr.mxu0 0.0
    %344 = vmatpush1.msra.mxu0 0.0
    %345 = vmatprep.subr.mxu0 0.0
    %346 = vmatpush1.msra.mxu0 0.0
    %347 = vmatprep.subr.mxu0 0.0
    %348 = vmatpush1.msra.mxu0 0.0
    %349 = vmatprep.subr.mxu0 0.0
    %350 = vmatpush1.msra.mxu0 0.0
    %351 = vmatprep.subr.mxu0 0.0
    %352 = vmatpush1.msra.mxu0 0.0
    %353 = vmatprep.subr.mxu0 0.0
    %354 = vmatpush1.msra.mxu0 0.0
    %355 = vmatprep.subr.mxu0 0.0
    %356 = vmatpush1.msra.mxu0 0.0
    %357 = vmatprep.subr.mxu0 0.0
    %358 = vmatpush1.msra.mxu0 0.0
    %359 = vmatprep.subr.mxu0 0.0
    %360 = vmatpush1.msra.mxu0 0.0
    %361 = vmatprep.subr.mxu0 0.0
    %362 = vmatpush1.msra.mxu0 0.0
    %363 = vmatprep.subr.mxu0 0.0
    %364 = vmatpush1.msra.mxu0 0.0
    %365 = vmatprep.subr.mxu0 0.0
    %366 = vmatpush1.msra.mxu0 0.0
    %367 = vmatprep.subr.mxu0 0.0
    %368 = vmatpush1.msra.mxu0 0.0
    %369 = vmatprep.subr.mxu0 0.0
    %370 = vmatpush1.msra.mxu0 0.0
    %371 = vmatprep.mubr.f32.mxu0 0.0
    %372 = vmatmul.mubr.f32.gmra.mrb[0].mxu0 %v283
    %v373 = vpop.f32.mrb[0].mxu0
    %v374 = vadd.f32 %v305, %v373
    %v375 = vpop.f32.mrb[0].mxu0
    %376 = vdwg.mxu0
    %vm377 = vcmp.gt.f32.partialorder %v374, 0.0
    %v378 = vmul.f32 %v374, 0.01
    %v379 = vsel %vm377, %v374, %v378
    %v380 = vld [vmem:[#allocation10] sm:$0xff]
    %v381 = vld [vmem:[#allocation10 + $0x8] sm:$0xff]
    %v382 = vld [vmem:[#allocation10 + $0x10] sm:$0xff]
    %v383 = vld [vmem:[#allocation10 + $0x18] sm:$0xff]
    %v384 = vld [vmem:[#allocation10 + $0x20] sm:$0xff]
    %v385 = vld [vmem:[#allocation10 + $0x28] sm:$0xff]
    %v386 = vld [vmem:[#allocation10 + $0x30] sm:$0xff]
    %v387 = vld [vmem:[#allocation10 + $0x38] sm:$0xff]
    %v388 = vld [vmem:[#allocation10 + $0x40] sm:$0xff]
    %v389 = vld [vmem:[#allocation10 + $0x48] sm:$0xff]
    %v390 = vld [vmem:[#allocation10 + $0x50] sm:$0xff]
    %v391 = vld [vmem:[#allocation10 + $0x58] sm:$0xff]
    %v392 = vld [vmem:[#allocation10 + $0x60] sm:$0xff]
    %v393 = vld [vmem:[#allocation10 + $0x68] sm:$0xff]
    %v394 = vld [vmem:[#allocation10 + $0x70] sm:$0xff]
    %v395 = vld [vmem:[#allocation10 + $0x78] sm:$0xff]
    %v396 = vld [vmem:[%s8] sm:$0x1]
    %v398 = vlaneseq
    %v399 = vshrl.u32 %v398, 7
    %v400 = vsub.s32 0, %v399
    %v401 = vrot.slane %v396, %v400
    %403 = vmatprep.subr.mxu0 0.0
    %404 = vmatpush1.msra.mxu0 %v380
    %405 = vmatprep.subr.mxu0 0.0
    %406 = vmatpush1.msra.mxu0 %v381
    %407 = vmatprep.subr.mxu0 0.0
    %408 = vmatpush1.msra.mxu0 %v382
    %409 = vmatprep.subr.mxu0 0.0
    %410 = vmatpush1.msra.mxu0 %v383
    %411 = vmatprep.subr.mxu0 0.0
    %412 = vmatpush1.msra.mxu0 %v384
    %413 = vmatprep.subr.mxu0 0.0
    %414 = vmatpush1.msra.mxu0 %v385
    %415 = vmatprep.subr.mxu0 0.0
    %416 = vmatpush1.msra.mxu0 %v386
    %417 = vmatprep.subr.mxu0 0.0
    %418 = vmatpush1.msra.mxu0 %v387
    %419 = vmatprep.subr.mxu0 0.0
    %420 = vmatpush1.msra.mxu0 %v388
    %421 = vmatprep.subr.mxu0 0.0
    %422 = vmatpush1.msra.mxu0 %v389
    %423 = vmatprep.subr.mxu0 0.0
    %424 = vmatpush1.msra.mxu0 %v390
    %425 = vmatprep.subr.mxu0 0.0
    %426 = vmatpush1.msra.mxu0 %v391
    %427 = vmatprep.subr.mxu0 0.0
    %428 = vmatpush1.msra.mxu0 %v392
    %429 = vmatprep.subr.mxu0 0.0
    %430 = vmatpush1.msra.mxu0 %v393
    %431 = vmatprep.subr.mxu0 0.0
    %432 = vmatpush1.msra.mxu0 %v394
    %433 = vmatprep.subr.mxu0 0.0
    %434 = vmatpush1.msra.mxu0 %v395
    %435 = vmatprep.subr.mxu0 0.0
    %436 = vmatpush1.msra.mxu0 0.0
    %437 = vmatprep.subr.mxu0 0.0
    %438 = vmatpush1.msra.mxu0 0.0
    %439 = vmatprep.subr.mxu0 0.0
    %440 = vmatpush1.msra.mxu0 0.0
    %441 = vmatprep.subr.mxu0 0.0
    %442 = vmatpush1.msra.mxu0 0.0
    %443 = vmatprep.subr.mxu0 0.0
    %444 = vmatpush1.msra.mxu0 0.0
    %445 = vmatprep.subr.mxu0 0.0
    %446 = vmatpush1.msra.mxu0 0.0
    %447 = vmatprep.subr.mxu0 0.0
    %448 = vmatpush1.msra.mxu0 0.0
    %449 = vmatprep.subr.mxu0 0.0
    %450 = vmatpush1.msra.mxu0 0.0
    %451 = vmatprep.subr.mxu0 0.0
    %452 = vmatpush1.msra.mxu0 0.0
    %453 = vmatprep.subr.mxu0 0.0
    %454 = vmatpush1.msra.mxu0 0.0
    %455 = vmatprep.subr.mxu0 0.0
    %456 = vmatpush1.msra.mxu0 0.0
    %457 = vmatprep.subr.mxu0 0.0
    %458 = vmatpush1.msra.mxu0 0.0
    %459 = vmatprep.subr.mxu0 0.0
    %460 = vmatpush1.msra.mxu0 0.0
    %461 = vmatprep.subr.mxu0 0.0
    %462 = vmatpush1.msra.mxu0 0.0
    %463 = vmatprep.subr.mxu0 0.0
    %464 = vmatpush1.msra.mxu0 0.0
    %465 = vmatprep.subr.mxu0 0.0
    %466 = vmatpush1.msra.mxu0 0.0
    %467 = vmatprep.mubr.f32.mxu0 0.0
    %468 = vmatmul.mubr.f32.gmra.mrb[0].mxu0 %v379
    %v469 = vpop.f32.mrb[0].mxu0
    %v470 = vadd.f32 %v401, %v469
    %v471 = vpop.f32.mrb[0].mxu0
    %472 = vdwg.mxu0
    %473 = vst [vmem:[#allocation11] sm:$0xff] %v470
    // Predicated region
    $region58: #{tpu_custom_call.1} parent=1 // pred_check
      _
    $region59: #{tpu_custom_call.1} parent=1 // pred_check_branch
      %475 = sbr.rel (0) target = $region61
    $region60: #{tpu_custom_call.1} parent=1 // pred_region
      %s477 = ssub.s32 128, 128
      %478 = vsyncadd [#allocation4], %s477
      %s480 = sshll.u32 [#allocation11], 4
      %s481 = int_to_ptr.vmem [resolvable:$true] %s480
      %483 = dma.vmem_to_hbm [thread:$0]  %s481, 128, %s9, [#allocation4]
    $region61: #{tpu_custom_call.1} parent=1 // pred_fallthru
      _
    // Predicated region
    $region62: #{tpu_custom_call.1} parent=1 // pred_check
      _
    $region63: #{tpu_custom_call.1} parent=1 // pred_check_branch
      %485 = sbr.rel (0) target = $region65
    $region64: #{tpu_custom_call.1} parent=1 // pred_region
      %486 = dma.done [#allocation4], 128
    $region65: #{tpu_custom_call.1} parent=1 // pred_fallthru
      _
    %487 = vsyncpa [#allocation3], 1
    %488 = vsyncpa [#allocation6], 1
    %489 = vsyncpa [#allocation9], 1
    %490 = vsyncpa [#allocation4], 1

// kernel: tpu_custom_call.1
$region0: #{tpu_custom_call.1}
  #allocation0 [shape = 'u32[]', space=smem, size = 0x4, offset = 0x4, fixed_abs, tag = 'smem constant byte address 0x4 - core index']
  #allocation1 [shape = 'u32[144,128]{1,0:T(1,128)}', space=vmem, size = 0x12000, scoped, tag = 'internal scratch']
  %s0 = inlined_call_operand.hbm [shape: f32[8,32], index: 0, kind: input, shape index: {}]
  %s1 = inlined_call_operand.hbm [shape: f32[32,128], index: 1, kind: input, shape index: {}]
  %s2 = inlined_call_operand.vmem [shape: f32[1,128], index: 2, kind: input, shape index: {}]
  %s3 = inlined_call_operand.hbm [shape: f32[128,128], index: 3, kind: input, shape index: {}]
  %s4 = inlined_call_operand.vmem [shape: f32[1,128], index: 4, kind: input, shape index: {}]
  %s5 = inlined_call_operand.hbm [shape: f32[128,128], index: 5, kind: input, shape index: {}]
  %s6 = inlined_call_operand.vmem [shape: f32[1,128], index: 6, kind: input, shape index: {}]
  %s7 = inlined_call_operand.hbm [shape: f32[128,128], index: 7, kind: input, shape index: {}]
  %s8 = inlined_call_operand.vmem [shape: f32[1,128], index: 8, kind: input, shape index: {}]
  %s9 = inlined_call_operand.hbm [shape: f32[8,128], index: 9, kind: output, shape index: {}]
  %s10 = sld [smem:[#allocation0]]
  $region66: #{tpu_custom_call.1} parent=0
    _
  %s12 = ssub.s32 1, %s10
  %s13 = scalar_select 0, %s12, %s10
  $region1: #{tpu_custom_call.1} parent=0
    #allocation2 [shape = 'u8[4096]{0}', space=vmem, size = 0x1000, scoped, tag = 'input window, operand 0, single buffered']
    #allocation3 [shape = 's32[1]{0}', space=sflag, size = 0x4, scoped, tag = 'scoped memory for tpu_custom_call.1']
    #allocation4 [shape = 's32[1]{0}', space=sflag, size = 0x4, scoped, tag = 'scoped memory for tpu_custom_call.1']
    #allocation5 [shape = 'u8[16384]{0}', space=vmem, size = 0x4000, scoped, tag = 'input window, operand 1, single buffered']
    #allocation6 [shape = 's32[1]{0}', space=sflag, size = 0x4, scoped, tag = 'scoped memory for tpu_custom_call.1']
    #allocation7 [shape = 'u8[65536]{0}', space=vmem, size = 0x10000, scoped, tag = 'input window, operand 3, single buffered']
    #allocation8 [shape = 'u8[65536]{0}', space=vmem, size = 0x10000, scoped, tag = 'input window, operand 5, single buffered']
    #allocation9 [shape = 's32[1]{0}', space=sflag, size = 0x4, scoped, tag = 'scoped memory for tpu_custom_call.1']
    #allocation10 [shape = 'u8[65536]{0}', space=vmem, size = 0x10000, scoped, tag = 'input window, operand 7, single buffered']
    #allocation11 [shape = 'u8[4096]{0}', space=vmem, size = 0x1000, scoped, tag = 'output window, operand 0, single buffered']
    %14 = vsyncpa [#allocation3], 0
    %15 = vsyncpa [#allocation6], 0
    %16 = vsyncpa [#allocation9], 0
    %17 = vsyncpa [#allocation4], 0
    // Predicated region
    $region2: #{tpu_custom_call.1} parent=1 // pred_check
      _
    $region3: #{tpu_custom_call.1} parent=1 // pred_check_branch
      %19 = sbr.rel (0) target = $region5
    $region4: #{tpu_custom_call.1} parent=1 // pred_region
      %s21 = ssub.s32 128, 128
      %22 = vsyncadd [#allocation3], %s21
      %s24 = sshll.u32 [#allocation2], 4
      %s25 = int_to_ptr.vmem [resolvable:$true] %s24
      %27 = dma.hbm_to_vmem [thread:$0]  %s0, 128, %s25, [#allocation3]
    $region5: #{tpu_custom_call.1} parent=1 // pred_fallthru
      _
    // Predicated region
    $region6: #{tpu_custom_call.1} parent=1 // pred_check
      _
    $region7: #{tpu_custom_call.1} parent=1 // pred_check_branch
      %29 = sbr.rel (0) target = $region9
    $region8: #{tpu_custom_call.1} parent=1 // pred_region
      %s31 = ssub.s32 512, 512
      %32 = vsyncadd [#allocation6], %s31
      %s33 = sshll.u32 [#allocation5], 4
      %s34 = int_to_ptr.vmem [resolvable:$true] %s33
      %39 = dma.hbm_to_vmem [thread:$0]  %s1, 512, %s34, [#allocation6], 128, 128, 8
    $region9: #{tpu_custom_call.1} parent=1 // pred_fallthru
      _
    // Predicated region
    $region10: #{tpu_custom_call.1} parent=1 // pred_check
      _
    $region11: #{tpu_custom_call.1} parent=1 // pred_check_branch
      %41 = sbr.rel (0) target = $region13
    $region12: #{tpu_custom_call.1} parent=1 // pred_region
      _
    $region13: #{tpu_custom_call.1} parent=1 // pred_fallthru
      _
    // Predicated region
    $region14: #{tpu_custom_call.1} parent=1 // pred_check
      _
    $region15: #{tpu_custom_call.1} parent=1 // pred_check_branch
      %43 = sbr.rel (0) target = $region17
    $region16: #{tpu_custom_call.1} parent=1 // pred_region
      %s45 = ssub.s32 2048, 2048
      %46 = vsyncadd [#allocation6], %s45
      %s47 = sshll.u32 [#allocation7], 4
      %s48 = int_to_ptr.vmem [resolvable:$true] %s47
      %53 = dma.hbm_to_vmem [thread:$0]  %s3, 2048, %s48, [#allocation6], 128, 128, 8
    $region17: #{tpu_custom_call.1} parent=1 // pred_fallthru
      _
    // Predicated region
    $region18: #{tpu_custom_call.1} parent=1 // pred_check
      _
    $region19: #{tpu_custom_call.1} parent=1 // pred_check_branch
      %55 = sbr.rel (0) target = $region21
    $region20: #{tpu_custom_call.1} parent=1 // pred_region
      _
    $region21: #{tpu_custom_call.1} parent=1 // pred_fallthru
      _
    // Predicated region
    $region22: #{tpu_custom_call.1} parent=1 // pred_check
      _
    $region23: #{tpu_custom_call.1} parent=1 // pred_check_branch
      %57 = sbr.rel (0) target = $region25
    $region24: #{tpu_custom_call.1} parent=1 // pred_region
      %s59 = ssub.s32 2048, 2048
      %60 = vsyncadd [#allocation9], %s59
      %s61 = sshll.u32 [#allocation8], 4
      %s62 = int_to_ptr.vmem [resolvable:$true] %s61
      %67 = dma.hbm_to_vmem [thread:$0]  %s5, 2048, %s62, [#allocation9], 128, 128, 8
    $region25: #{tpu_custom_call.1} parent=1 // pred_fallthru
      _
    // Predicated region
    $region26: #{tpu_custom_call.1} parent=1 // pred_check
      _
    $region27: #{tpu_custom_call.1} parent=1 // pred_check_branch
      %69 = sbr.rel (0) target = $region29
    $region28: #{tpu_custom_call.1} parent=1 // pred_region
      _
    $region29: #{tpu_custom_call.1} parent=1 // pred_fallthru
      _
    // Predicated region
    $region30: #{tpu_custom_call.1} parent=1 // pred_check
      _
    $region31: #{tpu_custom_call.1} parent=1 // pred_check_branch
      %71 = sbr.rel (0) target = $region33
    $region32: #{tpu_custom_call.1} parent=1 // pred_region
      %s73 = ssub.s32 2048, 2048
      %74 = vsyncadd [#allocation9], %s73
      %s75 = sshll.u32 [#allocation10], 4
      %s76 = int_to_ptr.vmem [resolvable:$true] %s75
      %81 = dma.hbm_to_vmem [thread:$0]  %s7, 2048, %s76, [#allocation9], 128, 128, 8
    $region33: #{tpu_custom_call.1} parent=1 // pred_fallthru
      _
    // Predicated region
    $region34: #{tpu_custom_call.1} parent=1 // pred_check
      _
    $region35: #{tpu_custom_call.1} parent=1 // pred_check_branch
      %83 = sbr.rel (0) target = $region37
    $region36: #{tpu_custom_call.1} parent=1 // pred_region
      _
    $region37: #{tpu_custom_call.1} parent=1 // pred_fallthru
      _
    // Predicated region
    $region38: #{tpu_custom_call.1} parent=1 // pred_check
      _
    $region39: #{tpu_custom_call.1} parent=1 // pred_check_branch
      %85 = sbr.rel (0) target = $region41
    $region40: #{tpu_custom_call.1} parent=1 // pred_region
      %86 = dma.done [#allocation3], 128
    $region41: #{tpu_custom_call.1} parent=1 // pred_fallthru
      _
    // Predicated region
    $region42: #{tpu_custom_call.1} parent=1 // pred_check
      _
    $region43: #{tpu_custom_call.1} parent=1 // pred_check_branch
      %88 = sbr.rel (0) target = $region45
    $region44: #{tpu_custom_call.1} parent=1 // pred_region
      %89 = dma.done [#allocation6], 512
    $region45: #{tpu_custom_call.1} parent=1 // pred_fallthru
      _
    // Predicated region
    $region46: #{tpu_custom_call.1} parent=1 // pred_check
      _
    $region47: #{tpu_custom_call.1} parent=1 // pred_check_branch
      %91 = sbr.rel (0) target = $region49
    $region48: #{tpu_custom_call.1} parent=1 // pred_region
      %92 = dma.done [#allocation6], 2048
    $region49: #{tpu_custom_call.1} parent=1 // pred_fallthru
      _
    // Predicated region
    $region50: #{tpu_custom_call.1} parent=1 // pred_check
      _
    $region51: #{tpu_custom_call.1} parent=1 // pred_check_branch
      %94 = sbr.rel (0) target = $region53
    $region52: #{tpu_custom_call.1} parent=1 // pred_region
      %95 = dma.done [#allocation9], 2048
    $region53: #{tpu_custom_call.1} parent=1 // pred_fallthru
      _
    // Predicated region
    $region54: #{tpu_custom_call.1} parent=1 // pred_check
      _
    $region55: #{tpu_custom_call.1} parent=1 // pred_check_branch
      %97 = sbr.rel (0) target = $region57
    $region56: #{tpu_custom_call.1} parent=1 // pred_region
      %98 = dma.done [#allocation9], 2048
    $region57: #{tpu_custom_call.1} parent=1 // pred_fallthru
      _
    %v99 = vld [vmem:[#allocation2] sm:$0xff]
    %v100 = vld [vmem:[#allocation5] sm:$0xff]
    %v101 = vld [vmem:[#allocation5 + $0x8] sm:$0xff]
    %v102 = vld [vmem:[#allocation5 + $0x10] sm:$0xff]
    %v103 = vld [vmem:[#allocation5 + $0x18] sm:$0xff]
    %v104 = vld [vmem:[%s2] sm:$0x1]
    %v106 = vlaneseq
    %v107 = vshrl.u32 %v106, 7
    %v108 = vsub.s32 0, %v107
    %v109 = vrot.slane %v104, %v108
    %vm111 = vcmask 261120
    %v113 = vsel %vm111, %v99, 0
    %115 = vmatprep.subr.mxu0 0.0
    %116 = vmatpush1.msra.mxu0 %v100
    %117 = vmatprep.subr.mxu0 0.0
    %118 = vmatpush1.msra.mxu0 %v101
    %119 = vmatprep.subr.mxu0 0.0
    %120 = vmatpush1.msra.mxu0 %v102
    %121 = vmatprep.subr.mxu0 0.0
    %122 = vmatpush1.msra.mxu0 %v103
    %123 = vmatprep.subr.mxu0 0.0
    %124 = vmatpush1.msra.mxu0 0.0
    %125 = vmatprep.subr.mxu0 0.0
    %126 = vmatpush1.msra.mxu0 0.0
    %127 = vmatprep.subr.mxu0 0.0
    %128 = vmatpush1.msra.mxu0 0.0
    %129 = vmatprep.subr.mxu0 0.0
    %130 = vmatpush1.msra.mxu0 0.0
    %131 = vmatprep.subr.mxu0 0.0
    %132 = vmatpush1.msra.mxu0 0.0
    %133 = vmatprep.subr.mxu0 0.0
    %134 = vmatpush1.msra.mxu0 0.0
    %135 = vmatprep.subr.mxu0 0.0
    %136 = vmatpush1.msra.mxu0 0.0
    %137 = vmatprep.subr.mxu0 0.0
    %138 = vmatpush1.msra.mxu0 0.0
    %139 = vmatprep.subr.mxu0 0.0
    %140 = vmatpush1.msra.mxu0 0.0
    %141 = vmatprep.subr.mxu0 0.0
    %142 = vmatpush1.msra.mxu0 0.0
    %143 = vmatprep.subr.mxu0 0.0
    %144 = vmatpush1.msra.mxu0 0.0
    %145 = vmatprep.subr.mxu0 0.0
    %146 = vmatpush1.msra.mxu0 0.0
    %147 = vmatprep.subr.mxu0 0.0
    %148 = vmatpush1.msra.mxu0 0.0
    %149 = vmatprep.subr.mxu0 0.0
    %150 = vmatpush1.msra.mxu0 0.0
    %151 = vmatprep.subr.mxu0 0.0
    %152 = vmatpush1.msra.mxu0 0.0
    %153 = vmatprep.subr.mxu0 0.0
    %154 = vmatpush1.msra.mxu0 0.0
    %155 = vmatprep.subr.mxu0 0.0
    %156 = vmatpush1.msra.mxu0 0.0
    %157 = vmatprep.subr.mxu0 0.0
    %158 = vmatpush1.msra.mxu0 0.0
    %159 = vmatprep.subr.mxu0 0.0
    %160 = vmatpush1.msra.mxu0 0.0
    %161 = vmatprep.subr.mxu0 0.0
    %162 = vmatpush1.msra.mxu0 0.0
    %163 = vmatprep.subr.mxu0 0.0
    %164 = vmatpush1.msra.mxu0 0.0
    %165 = vmatprep.subr.mxu0 0.0
    %166 = vmatpush1.msra.mxu0 0.0
    %167 = vmatprep.subr.mxu0 0.0
    %168 = vmatpush1.msra.mxu0 0.0
    %169 = vmatprep.subr.mxu0 0.0
    %170 = vmatpush1.msra.mxu0 0.0
    %171 = vmatprep.subr.mxu0 0.0
    %172 = vmatpush1.msra.mxu0 0.0
    %173 = vmatprep.subr.mxu0 0.0
    %174 = vmatpush1.msra.mxu0 0.0
    %175 = vmatprep.subr.mxu0 0.0
    %176 = vmatpush1.msra.mxu0 0.0
    %177 = vmatprep.subr.mxu0 0.0
    %178 = vmatpush1.msra.mxu0 0.0
    %179 = vmatprep.mubr.f32.mxu0 0.0
    %180 = vmatmul.mubr.f32.gmra.mrb[0].mxu0 %v113
    %v181 = vpop.f32.mrb[0].mxu0
    %v182 = vadd.f32 %v109, %v181
    %v183 = vpop.f32.mrb[0].mxu0
    %184 = vdwg.mxu0
    %vm185 = vcmp.gt.f32.partialorder %v182, 0.0
    %v186 = vmul.f32 %v182, 0.01
    %v187 = vsel %vm185, %v182, %v186
    %v188 = vld [vmem:[#allocation7] sm:$0xff]
    %v189 = vld [vmem:[#allocation7 + $0x8] sm:$0xff]
    %v190 = vld [vmem:[#allocation7 + $0x10] sm:$0xff]
    %v191 = vld [vmem:[#allocation7 + $0x18] sm:$0xff]
    %v192 = vld [vmem:[#allocation7 + $0x20] sm:$0xff]
    %v193 = vld [vmem:[#allocation7 + $0x28] sm:$0xff]
    %v194 = vld [vmem:[#allocation7 + $0x30] sm:$0xff]
    %v195 = vld [vmem:[#allocation7 + $0x38] sm:$0xff]
    %v196 = vld [vmem:[#allocation7 + $0x40] sm:$0xff]
    %v197 = vld [vmem:[#allocation7 + $0x48] sm:$0xff]
    %v198 = vld [vmem:[#allocation7 + $0x50] sm:$0xff]
    %v199 = vld [vmem:[#allocation7 + $0x58] sm:$0xff]
    %v200 = vld [vmem:[#allocation7 + $0x60] sm:$0xff]
    %v201 = vld [vmem:[#allocation7 + $0x68] sm:$0xff]
    %v202 = vld [vmem:[#allocation7 + $0x70] sm:$0xff]
    %v203 = vld [vmem:[#allocation7 + $0x78] sm:$0xff]
    %v204 = vld [vmem:[%s4] sm:$0x1]
    %v206 = vlaneseq
    %v207 = vshrl.u32 %v206, 7
    %v208 = vsub.s32 0, %v207
    %v209 = vrot.slane %v204, %v208
    %211 = vmatprep.subr.mxu0 0.0
    %212 = vmatpush1.msra.mxu0 %v188
    %213 = vmatprep.subr.mxu0 0.0
    %214 = vmatpush1.msra.mxu0 %v189
    %215 = vmatprep.subr.mxu0 0.0
    %216 = vmatpush1.msra.mxu0 %v190
    %217 = vmatprep.subr.mxu0 0.0
    %218 = vmatpush1.msra.mxu0 %v191
    %219 = vmatprep.subr.mxu0 0.0
    %220 = vmatpush1.msra.mxu0 %v192
    %221 = vmatprep.subr.mxu0 0.0
    %222 = vmatpush1.msra.mxu0 %v193
    %223 = vmatprep.subr.mxu0 0.0
    %224 = vmatpush1.msra.mxu0 %v194
    %225 = vmatprep.subr.mxu0 0.0
    %226 = vmatpush1.msra.mxu0 %v195
    %227 = vmatprep.subr.mxu0 0.0
    %228 = vmatpush1.msra.mxu0 %v196
    %229 = vmatprep.subr.mxu0 0.0
    %230 = vmatpush1.msra.mxu0 %v197
    %231 = vmatprep.subr.mxu0 0.0
    %232 = vmatpush1.msra.mxu0 %v198
    %233 = vmatprep.subr.mxu0 0.0
    %234 = vmatpush1.msra.mxu0 %v199
    %235 = vmatprep.subr.mxu0 0.0
    %236 = vmatpush1.msra.mxu0 %v200
    %237 = vmatprep.subr.mxu0 0.0
    %238 = vmatpush1.msra.mxu0 %v201
    %239 = vmatprep.subr.mxu0 0.0
    %240 = vmatpush1.msra.mxu0 %v202
    %241 = vmatprep.subr.mxu0 0.0
    %242 = vmatpush1.msra.mxu0 %v203
    %243 = vmatprep.subr.mxu0 0.0
    %244 = vmatpush1.msra.mxu0 0.0
    %245 = vmatprep.subr.mxu0 0.0
    %246 = vmatpush1.msra.mxu0 0.0
    %247 = vmatprep.subr.mxu0 0.0
    %248 = vmatpush1.msra.mxu0 0.0
    %249 = vmatprep.subr.mxu0 0.0
    %250 = vmatpush1.msra.mxu0 0.0
    %251 = vmatprep.subr.mxu0 0.0
    %252 = vmatpush1.msra.mxu0 0.0
    %253 = vmatprep.subr.mxu0 0.0
    %254 = vmatpush1.msra.mxu0 0.0
    %255 = vmatprep.subr.mxu0 0.0
    %256 = vmatpush1.msra.mxu0 0.0
    %257 = vmatprep.subr.mxu0 0.0
    %258 = vmatpush1.msra.mxu0 0.0
    %259 = vmatprep.subr.mxu0 0.0
    %260 = vmatpush1.msra.mxu0 0.0
    %261 = vmatprep.subr.mxu0 0.0
    %262 = vmatpush1.msra.mxu0 0.0
    %263 = vmatprep.subr.mxu0 0.0
    %264 = vmatpush1.msra.mxu0 0.0
    %265 = vmatprep.subr.mxu0 0.0
    %266 = vmatpush1.msra.mxu0 0.0
    %267 = vmatprep.subr.mxu0 0.0
    %268 = vmatpush1.msra.mxu0 0.0
    %269 = vmatprep.subr.mxu0 0.0
    %270 = vmatpush1.msra.mxu0 0.0
    %271 = vmatprep.subr.mxu0 0.0
    %272 = vmatpush1.msra.mxu0 0.0
    %273 = vmatprep.subr.mxu0 0.0
    %274 = vmatpush1.msra.mxu0 0.0
    %275 = vmatprep.mubr.f32.mxu0 0.0
    %276 = vmatmul.mubr.f32.gmra.mrb[0].mxu0 %v187
    %v277 = vpop.f32.mrb[0].mxu0
    %v278 = vadd.f32 %v209, %v277
    %v279 = vpop.f32.mrb[0].mxu0
    %280 = vdwg.mxu0
    %vm281 = vcmp.gt.f32.partialorder %v278, 0.0
    %v282 = vmul.f32 %v278, 0.01
    %v283 = vsel %vm281, %v278, %v282
    %v284 = vld [vmem:[#allocation8] sm:$0xff]
    %v285 = vld [vmem:[#allocation8 + $0x8] sm:$0xff]
    %v286 = vld [vmem:[#allocation8 + $0x10] sm:$0xff]
    %v287 = vld [vmem:[#allocation8 + $0x18] sm:$0xff]
    %v288 = vld [vmem:[#allocation8 + $0x20] sm:$0xff]
    %v289 = vld [vmem:[#allocation8 + $0x28] sm:$0xff]
    %v290 = vld [vmem:[#allocation8 + $0x30] sm:$0xff]
    %v291 = vld [vmem:[#allocation8 + $0x38] sm:$0xff]
    %v292 = vld [vmem:[#allocation8 + $0x40] sm:$0xff]
    %v293 = vld [vmem:[#allocation8 + $0x48] sm:$0xff]
    %v294 = vld [vmem:[#allocation8 + $0x50] sm:$0xff]
    %v295 = vld [vmem:[#allocation8 + $0x58] sm:$0xff]
    %v296 = vld [vmem:[#allocation8 + $0x60] sm:$0xff]
    %v297 = vld [vmem:[#allocation8 + $0x68] sm:$0xff]
    %v298 = vld [vmem:[#allocation8 + $0x70] sm:$0xff]
    %v299 = vld [vmem:[#allocation8 + $0x78] sm:$0xff]
    %v300 = vld [vmem:[%s6] sm:$0x1]
    %v302 = vlaneseq
    %v303 = vshrl.u32 %v302, 7
    %v304 = vsub.s32 0, %v303
    %v305 = vrot.slane %v300, %v304
    %307 = vmatprep.subr.mxu0 0.0
    %308 = vmatpush1.msra.mxu0 %v284
    %309 = vmatprep.subr.mxu0 0.0
    %310 = vmatpush1.msra.mxu0 %v285
    %311 = vmatprep.subr.mxu0 0.0
    %312 = vmatpush1.msra.mxu0 %v286
    %313 = vmatprep.subr.mxu0 0.0
    %314 = vmatpush1.msra.mxu0 %v287
    %315 = vmatprep.subr.mxu0 0.0
    %316 = vmatpush1.msra.mxu0 %v288
    %317 = vmatprep.subr.mxu0 0.0
    %318 = vmatpush1.msra.mxu0 %v289
    %319 = vmatprep.subr.mxu0 0.0
    %320 = vmatpush1.msra.mxu0 %v290
    %321 = vmatprep.subr.mxu0 0.0
    %322 = vmatpush1.msra.mxu0 %v291
    %323 = vmatprep.subr.mxu0 0.0
    %324 = vmatpush1.msra.mxu0 %v292
    %325 = vmatprep.subr.mxu0 0.0
    %326 = vmatpush1.msra.mxu0 %v293
    %327 = vmatprep.subr.mxu0 0.0
    %328 = vmatpush1.msra.mxu0 %v294
    %329 = vmatprep.subr.mxu0 0.0
    %330 = vmatpush1.msra.mxu0 %v295
    %331 = vmatprep.subr.mxu0 0.0
    %332 = vmatpush1.msra.mxu0 %v296
    %333 = vmatprep.subr.mxu0 0.0
    %334 = vmatpush1.msra.mxu0 %v297
    %335 = vmatprep.subr.mxu0 0.0
    %336 = vmatpush1.msra.mxu0 %v298
    %337 = vmatprep.subr.mxu0 0.0
    %338 = vmatpush1.msra.mxu0 %v299
    %339 = vmatprep.subr.mxu0 0.0
    %340 = vmatpush1.msra.mxu0 0.0
    %341 = vmatprep.subr.mxu0 0.0
    %342 = vmatpush1.msra.mxu0 0.0
    %343 = vmatprep.subr.mxu0 0.0
    %344 = vmatpush1.msra.mxu0 0.0
    %345 = vmatprep.subr.mxu0 0.0
    %346 = vmatpush1.msra.mxu0 0.0
    %347 = vmatprep.subr.mxu0 0.0
    %348 = vmatpush1.msra.mxu0 0.0
    %349 = vmatprep.subr.mxu0 0.0
    %350 = vmatpush1.msra.mxu0 0.0
    %351 = vmatprep.subr.mxu0 0.0
    %352 = vmatpush1.msra.mxu0 0.0
    %353 = vmatprep.subr.mxu0 0.0
    %354 = vmatpush1.msra.mxu0 0.0
    %355 = vmatprep.subr.mxu0 0.0
    %356 = vmatpush1.msra.mxu0 0.0
    %357 = vmatprep.subr.mxu0 0.0
    %358 = vmatpush1.msra.mxu0 0.0
    %359 = vmatprep.subr.mxu0 0.0
    %360 = vmatpush1.msra.mxu0 0.0
    %361 = vmatprep.subr.mxu0 0.0
    %362 = vmatpush1.msra.mxu0 0.0
    %363 = vmatprep.subr.mxu0 0.0
    %364 = vmatpush1.msra.mxu0 0.0
    %365 = vmatprep.subr.mxu0 0.0
    %366 = vmatpush1.msra.mxu0 0.0
    %367 = vmatprep.subr.mxu0 0.0
    %368 = vmatpush1.msra.mxu0 0.0
    %369 = vmatprep.subr.mxu0 0.0
    %370 = vmatpush1.msra.mxu0 0.0
    %371 = vmatprep.mubr.f32.mxu0 0.0
    %372 = vmatmul.mubr.f32.gmra.mrb[0].mxu0 %v283
    %v373 = vpop.f32.mrb[0].mxu0
    %v374 = vadd.f32 %v305, %v373
    %v375 = vpop.f32.mrb[0].mxu0
    %376 = vdwg.mxu0
    %vm377 = vcmp.gt.f32.partialorder %v374, 0.0
    %v378 = vmul.f32 %v374, 0.01
    %v379 = vsel %vm377, %v374, %v378
    %v380 = vld [vmem:[#allocation10] sm:$0xff]
    %v381 = vld [vmem:[#allocation10 + $0x8] sm:$0xff]
    %v382 = vld [vmem:[#allocation10 + $0x10] sm:$0xff]
    %v383 = vld [vmem:[#allocation10 + $0x18] sm:$0xff]
    %v384 = vld [vmem:[#allocation10 + $0x20] sm:$0xff]
    %v385 = vld [vmem:[#allocation10 + $0x28] sm:$0xff]
    %v386 = vld [vmem:[#allocation10 + $0x30] sm:$0xff]
    %v387 = vld [vmem:[#allocation10 + $0x38] sm:$0xff]
    %v388 = vld [vmem:[#allocation10 + $0x40] sm:$0xff]
    %v389 = vld [vmem:[#allocation10 + $0x48] sm:$0xff]
    %v390 = vld [vmem:[#allocation10 + $0x50] sm:$0xff]
    %v391 = vld [vmem:[#allocation10 + $0x58] sm:$0xff]
    %v392 = vld [vmem:[#allocation10 + $0x60] sm:$0xff]
    %v393 = vld [vmem:[#allocation10 + $0x68] sm:$0xff]
    %v394 = vld [vmem:[#allocation10 + $0x70] sm:$0xff]
    %v395 = vld [vmem:[#allocation10 + $0x78] sm:$0xff]
    %v396 = vld [vmem:[%s8] sm:$0x1]
    %v398 = vlaneseq
    %v399 = vshrl.u32 %v398, 7
    %v400 = vsub.s32 0, %v399
    %v401 = vrot.slane %v396, %v400
    %403 = vmatprep.subr.mxu0 0.0
    %404 = vmatpush1.msra.mxu0 %v380
    %405 = vmatprep.subr.mxu0 0.0
    %406 = vmatpush1.msra.mxu0 %v381
    %407 = vmatprep.subr.mxu0 0.0
    %408 = vmatpush1.msra.mxu0 %v382
    %409 = vmatprep.subr.mxu0 0.0
    %410 = vmatpush1.msra.mxu0 %v383
    %411 = vmatprep.subr.mxu0 0.0
    %412 = vmatpush1.msra.mxu0 %v384
    %413 = vmatprep.subr.mxu0 0.0
    %414 = vmatpush1.msra.mxu0 %v385
    %415 = vmatprep.subr.mxu0 0.0
    %416 = vmatpush1.msra.mxu0 %v386
    %417 = vmatprep.subr.mxu0 0.0
    %418 = vmatpush1.msra.mxu0 %v387
    %419 = vmatprep.subr.mxu0 0.0
    %420 = vmatpush1.msra.mxu0 %v388
    %421 = vmatprep.subr.mxu0 0.0
    %422 = vmatpush1.msra.mxu0 %v389
    %423 = vmatprep.subr.mxu0 0.0
    %424 = vmatpush1.msra.mxu0 %v390
    %425 = vmatprep.subr.mxu0 0.0
    %426 = vmatpush1.msra.mxu0 %v391
    %427 = vmatprep.subr.mxu0 0.0
    %428 = vmatpush1.msra.mxu0 %v392
    %429 = vmatprep.subr.mxu0 0.0
    %430 = vmatpush1.msra.mxu0 %v393
    %431 = vmatprep.subr.mxu0 0.0
    %432 = vmatpush1.msra.mxu0 %v394
    %433 = vmatprep.subr.mxu0 0.0
    %434 = vmatpush1.msra.mxu0 %v395
    %435 = vmatprep.subr.mxu0 0.0
    %436 = vmatpush1.msra.mxu0 0.0
    %437 = vmatprep.subr.mxu0 0.0
    %438 = vmatpush1.msra.mxu0 0.0
    %439 = vmatprep.subr.mxu0 0.0
    %440 = vmatpush1.msra.mxu0 0.0
    %441 = vmatprep.subr.mxu0 0.0
    %442 = vmatpush1.msra.mxu0 0.0
    %443 = vmatprep.subr.mxu0 0.0
    %444 = vmatpush1.msra.mxu0 0.0
    %445 = vmatprep.subr.mxu0 0.0
    %446 = vmatpush1.msra.mxu0 0.0
    %447 = vmatprep.subr.mxu0 0.0
    %448 = vmatpush1.msra.mxu0 0.0
    %449 = vmatprep.subr.mxu0 0.0
    %450 = vmatpush1.msra.mxu0 0.0
    %451 = vmatprep.subr.mxu0 0.0
    %452 = vmatpush1.msra.mxu0 0.0
    %453 = vmatprep.subr.mxu0 0.0
    %454 = vmatpush1.msra.mxu0 0.0
    %455 = vmatprep.subr.mxu0 0.0
    %456 = vmatpush1.msra.mxu0 0.0
    %457 = vmatprep.subr.mxu0 0.0
    %458 = vmatpush1.msra.mxu0 0.0
    %459 = vmatprep.subr.mxu0 0.0
    %460 = vmatpush1.msra.mxu0 0.0
    %461 = vmatprep.subr.mxu0 0.0
    %462 = vmatpush1.msra.mxu0 0.0
    %463 = vmatprep.subr.mxu0 0.0
    %464 = vmatpush1.msra.mxu0 0.0
    %465 = vmatprep.subr.mxu0 0.0
    %466 = vmatpush1.msra.mxu0 0.0
    %467 = vmatprep.mubr.f32.mxu0 0.0
    %468 = vmatmul.mubr.f32.gmra.mrb[0].mxu0 %v379
    %v469 = vpop.f32.mrb[0].mxu0
    %v470 = vadd.f32 %v401, %v469
    %v471 = vpop.f32.mrb[0].mxu0
    %472 = vdwg.mxu0
    %473 = vst [vmem:[#allocation11] sm:$0xff] %v470
    // Predicated region
    $region58: #{tpu_custom_call.1} parent=1 // pred_check
      _
    $region59: #{tpu_custom_call.1} parent=1 // pred_check_branch
      %475 = sbr.rel (0) target = $region61
    $region60: #{tpu_custom_call.1} parent=1 // pred_region
      %s477 = ssub.s32 128, 128
      %478 = vsyncadd [#allocation4], %s477
      %s480 = sshll.u32 [#allocation11], 4
      %s481 = int_to_ptr.vmem [resolvable:$true] %s480
      %483 = dma.vmem_to_hbm [thread:$0]  %s481, 128, %s9, [#allocation4]
    $region61: #{tpu_custom_call.1} parent=1 // pred_fallthru
      _
    // Predicated region
    $region62: #{tpu_custom_call.1} parent=1 // pred_check
      _
    $region63: #{tpu_custom_call.1} parent=1 // pred_check_branch
      %485 = sbr.rel (0) target = $region65
    $region64: #{tpu_custom_call.1} parent=1 // pred_region
      %486 = dma.done [#allocation4], 128
    $region65: #{tpu_custom_call.1} parent=1 // pred_fallthru
      _
    %487 = vsyncpa [#allocation3], 1
    %488 = vsyncpa [#allocation6], 1
    %489 = vsyncpa [#allocation9], 1
    %490 = vsyncpa [#allocation4], 1

</llo_original>
